<compile_context>
chip_gen: v5e
topology: v5e:2x2
jax: 0.10.0
libtpu: 0.0.40
codegen_flags: <defaults>
</compile_context>

<pallas_src>
import jax
import jax.numpy as jnp
from jax.experimental import pallas as pl
from jax.experimental.pallas import tpu as pltpu  # noqa: F401  (TPU backend)

# ----------------------------- model sizes ---------------------------------
B = 2    # batch
T = 8    # sequence length (video frames)
F = 64   # dim_vid
H = 32   # dim_hidden


# ------------------------------- kernel ------------------------------------
def encoder_gru_kernel(x_ref,        # (T*B, F) f32, time-major flattened input
                       w_xg_ref,     # (F, 3H) bf16  folded Linear + input-gate weight (r|z|n)
                       b_xg_ref,     # (1, 3H) f32   folded bias
                       w_h_ref,      # (H, 3H) bf16  concatenated recurrent weight (r|z|n)
                       b_h_ref,      # (1, 3H) f32   recurrent bias
                       out_ref,      # (T, B, H) f32 time-major hidden states
                       hid_ref):     # (1, B, H) f32 final hidden state
    bf16 = jnp.bfloat16

    # ---- hoisted, h-independent work: ONE MXU matmul covers Linear(dim_vid->H)
    #      and all three input-gate projections for every (t, b) row.
    # TODO(synk): nn.Dropout(p=0.25) is stochastic in training mode; eval-mode identity
    #             is assumed here, and the Linear/input-gate weight fold is only valid
    #             under that assumption.
    x = x_ref[...].astype(bf16)                                            # (T*B, F)
    gi = (jnp.dot(x, w_xg_ref[...], preferred_element_type=jnp.float32)
          + b_xg_ref[...])                                                 # (T*B, 3H)

    w_h = w_h_ref[...]
    b_h = b_h_ref[...]

    # ---- serial GRU recurrence (PyTorch gate order r|z|n), statically unrolled (T=8)
    h = jnp.zeros((B, H), jnp.float32)
    for t in range(T):                      # unrolled at trace time
        row = t * B
        gi_t = gi[row:row + B]                                             # (B, 3H)
        # one fused recurrent matmul per step
        gh = (jnp.dot(h.astype(bf16), w_h, preferred_element_type=jnp.float32)
              + b_h)                                                       # (B, 3H)
        # one sigmoid over the concatenated r|z lanes
        rz = jax.nn.sigmoid(gi_t[:, :2 * H] + gh[:, :2 * H])
        r = rz[:, :H]
        z = rz[:, H:]
        n = jnp.tanh(gi_t[:, 2 * H:] + r * gh[:, 2 * H:])                  # b_hn inside r*(...)
        h = (1.0 - z) * n + z * h
        out_ref[t] = h                      # VMEM store; single HBM writeback at kernel end

    hid_ref[0] = h


# --------------------------- one-time param prep -----------------------------
def fold_params(params):
    """Fold/cast PyTorch-style parameters ONCE, outside the jitted forward.

    gi = (x @ w_proj + b_proj) @ w_i + b_i  ==  x @ (w_proj @ w_i) + (b_proj @ w_i + b_i)
    (valid because dropout is identity in eval mode).
    """
    w_xg = jnp.dot(params["w_proj"], params["w_i"])                    # (F, 3H) f32
    b_xg = jnp.dot(params["b_proj"], params["w_i"]) + params["b_i"]    # (1, 3H) f32
    return {
        "w_xg": w_xg.astype(jnp.bfloat16),
        "b_xg": b_xg.astype(jnp.float32),
        "w_h":  params["w_h"].astype(jnp.bfloat16),
        "b_h":  params["b_h"].astype(jnp.float32),
    }


# ------------------------------- wrapper ------------------------------------
@jax.jit
def encoder_forward(vid_feats, folded):
    """vid_feats: (B, T, F) batch-first -> (output (B, T, H), hidden (1, B, H))."""
    # time-major flatten so timestep t occupies rows [t*B, (t+1)*B)
    x_flat = jnp.transpose(vid_feats, (1, 0, 2)).reshape(T * B, F)

    out_tbh, hidden = pl.pallas_call(
        encoder_gru_kernel,
        out_shape=(jax.ShapeDtypeStruct((T, B, H), jnp.float32),
                   jax.ShapeDtypeStruct((1, B, H), jnp.float32)),
    )(x_flat, folded["w_xg"], folded["b_xg"], folded["w_h"], folded["b_h"])

    output = jnp.transpose(out_tbh, (1, 0, 2))      # (B, T, H) batch-first, like nn.GRU
    return output, hidden


class EncoderRNNPallas:
    """Mirrors PyTorch EncoderRNN.forward(input) -> (output, hidden). Eval mode."""

    def __init__(self, params):
        self.folded = fold_params(params)           # weight folding / casting done once

    def __call__(self, input):
        return encoder_forward(input, self.folded)


# ----------------------------- params / reference ---------------------------
def init_params(key):
    ks = jax.random.split(key, 6)
    s = 0.1
    return {
        "w_proj": s * jax.random.normal(ks[0], (F, H), jnp.float32),
        "b_proj": s * jax.random.normal(ks[1], (1, H), jnp.float32),
        "w_i":    s * jax.random.normal(ks[2], (H, 3 * H), jnp.float32),   # (in, 3H), r|z|n
        "w_h":    s * jax.random.normal(ks[3], (H, 3 * H), jnp.float32),   # (H, 3H),  r|z|n
        "b_i":    s * jax.random.normal(ks[4], (1, 3 * H), jnp.float32),
        "b_h":    s * jax.random.normal(ks[5], (1, 3 * H), jnp.float32),
    }


def encoder_reference(vid_feats, p):
    """Pure-JAX f32 reference with exact PyTorch EncoderRNN (eval) semantics."""
    x = vid_feats.reshape(-1, F)
    xp = (jnp.dot(x, p["w_proj"]) + p["b_proj"]).reshape(B, T, H)
    h = jnp.zeros((B, H), jnp.float32)
    outs = []
    for t in range(T):
        gi = jnp.dot(xp[:, t, :], p["w_i"]) + p["b_i"]
        gh = jnp.dot(h, p["w_h"]) + p["b_h"]
        r = jax.nn.sigmoid(gi[:, 0:H] + gh[:, 0:H])
        z = jax.nn.sigmoid(gi[:, H:2 * H] + gh[:, H:2 * H])
        n = jnp.tanh(gi[:, 2 * H:] + r * gh[:, 2 * H:])
        h = (1.0 - z) * n + z * h
        outs.append(h)
    output = jnp.stack(outs, axis=1)                 # (B, T, H)
    hidden = output[:, -1, :][None]                  # (1, B, H)
    return output, hidden


# --------------------------------- main --------------------------------------
if __name__ == "__main__":
    key = jax.random.PRNGKey(0)
    k_feat, k_param = jax.random.split(key)

    params = init_params(k_param)
    model = EncoderRNNPallas(params)

    vid_feats = jax.random.normal(k_feat, (B, T, F), jnp.float32)

    output, hidden = model(vid_feats)
    jax.block_until_ready((output, hidden))

    assert output.shape == (B, T, H) and output.dtype == jnp.float32
    assert hidden.shape == (1, B, H) and hidden.dtype == jnp.float32

    ref_out, ref_hid = encoder_reference(vid_feats, params)
    assert jnp.allclose(output, ref_out, atol=1e-2, rtol=1e-2)
    assert jnp.allclose(hidden, ref_hid, atol=1e-2, rtol=1e-2)

    print("KERNEL_OK")
</pallas_src>

<mosaic_0001>
module attributes {stable_mosaic.version = 11 : i64} {
  func.func @encoder_gru_kernel(%arg0: memref<16x64xf32, #tpu.memory_space<vmem>>, %arg1: memref<64x96xbf16, #tpu.memory_space<vmem>>, %arg2: memref<1x96xf32, #tpu.memory_space<vmem>>, %arg3: memref<32x96xbf16, #tpu.memory_space<vmem>>, %arg4: memref<1x96xf32, #tpu.memory_space<vmem>>, %arg5: memref<8x2x32xf32, #tpu.memory_space<vmem>>, %arg6: memref<1x2x32xf32, #tpu.memory_space<vmem>>) attributes {dimension_semantics = [], scalar_prefetch = 0 : i64, scratch_operands = 0 : i64, tpu.core_type = #tpu.core_type<tc>} {
    %c0 = arith.constant 0 : index
    %c0_0 = arith.constant 0 : index
    %0 = vector.load %arg0[%c0, %c0_0] : memref<16x64xf32, #tpu.memory_space<vmem>>, vector<16x64xf32>
    %1 = arith.truncf %0 : vector<16x64xf32> to vector<16x64xbf16>
    %c0_1 = arith.constant 0 : index
    %c0_2 = arith.constant 0 : index
    %2 = vector.load %arg1[%c0_1, %c0_2] : memref<64x96xbf16, #tpu.memory_space<vmem>>, vector<64x96xbf16>
    %cst = arith.constant dense<0.000000e+00> : vector<16x96xf32>
    %3 = tpu.matmul %1, %2, %cst {dimension_numbers = #tpu.dot_dimension_numbers<[1], [0], [0], [1], [0, 0, 1, 1], [], []>} : vector<16x64xbf16>, vector<64x96xbf16>, vector<16x96xf32> -> vector<16x96xf32>
    %c0_3 = arith.constant 0 : index
    %c0_4 = arith.constant 0 : index
    %4 = vector.load %arg2[%c0_3, %c0_4] : memref<1x96xf32, #tpu.memory_space<vmem>>, vector<1x96xf32>
    %5 = vector.broadcast %4 : vector<1x96xf32> to vector<16x96xf32>
    %6 = arith.addf %3, %5 : vector<16x96xf32>
    %c0_5 = arith.constant 0 : index
    %c0_6 = arith.constant 0 : index
    %7 = vector.load %arg3[%c0_5, %c0_6] : memref<32x96xbf16, #tpu.memory_space<vmem>>, vector<32x96xbf16>
    %c0_7 = arith.constant 0 : index
    %c0_8 = arith.constant 0 : index
    %8 = vector.load %arg4[%c0_7, %c0_8] : memref<1x96xf32, #tpu.memory_space<vmem>>, vector<1x96xf32>
    %cst_9 = arith.constant 0.000000e+00 : f32
    %9 = vector.broadcast %cst_9 : f32 to vector<2x32xf32>
    %10 = vector.extract_strided_slice %6 {offsets = [0, 0], sizes = [2, 96], strides = [1, 1]} : vector<16x96xf32> to vector<2x96xf32>
    %11 = arith.truncf %9 : vector<2x32xf32> to vector<2x32xbf16>
    %cst_10 = arith.constant dense<0.000000e+00> : vector<2x96xf32>
    %12 = tpu.matmul %11, %7, %cst_10 {dimension_numbers = #tpu.dot_dimension_numbers<[1], [0], [0], [1], [0, 0, 1, 1], [], []>} : vector<2x32xbf16>, vector<32x96xbf16>, vector<2x96xf32> -> vector<2x96xf32>
    %13 = vector.broadcast %8 : vector<1x96xf32> to vector<2x96xf32>
    %14 = arith.addf %12, %13 : vector<2x96xf32>
    %15 = vector.extract_strided_slice %10 {offsets = [0, 0], sizes = [2, 64], strides = [1, 1]} : vector<2x96xf32> to vector<2x64xf32>
    %16 = vector.extract_strided_slice %14 {offsets = [0, 0], sizes = [2, 64], strides = [1, 1]} : vector<2x96xf32> to vector<2x64xf32>
    %17 = arith.addf %15, %16 : vector<2x64xf32>
    %18 = arith.negf %17 : vector<2x64xf32>
    %19 = math.exp %18 : vector<2x64xf32>
    %cst_11 = arith.constant 1.000000e+00 : f32
    %20 = vector.broadcast %cst_11 : f32 to vector<2x64xf32>
    %21 = arith.addf %20, %19 : vector<2x64xf32>
    %22 = arith.divf %20, %21 : vector<2x64xf32>
    %23 = vector.extract_strided_slice %22 {offsets = [0, 0], sizes = [2, 32], strides = [1, 1]} : vector<2x64xf32> to vector<2x32xf32>
    %24 = vector.extract_strided_slice %22 {offsets = [0, 32], sizes = [2, 32], strides = [1, 1]} : vector<2x64xf32> to vector<2x32xf32>
    %25 = vector.extract_strided_slice %10 {offsets = [0, 64], sizes = [2, 32], strides = [1, 1]} : vector<2x96xf32> to vector<2x32xf32>
    %26 = vector.extract_strided_slice %14 {offsets = [0, 64], sizes = [2, 32], strides = [1, 1]} : vector<2x96xf32> to vector<2x32xf32>
    %27 = arith.mulf %23, %26 : vector<2x32xf32>
    %28 = arith.addf %25, %27 : vector<2x32xf32>
    %29 = math.tanh %28 : vector<2x32xf32>
    %cst_12 = arith.constant 1.000000e+00 : f32
    %30 = vector.broadcast %cst_12 : f32 to vector<2x32xf32>
    %31 = arith.subf %30, %24 : vector<2x32xf32>
    %32 = arith.mulf %31, %29 : vector<2x32xf32>
    %33 = arith.mulf %24, %9 : vector<2x32xf32>
    %34 = arith.addf %32, %33 : vector<2x32xf32>
    %c0_13 = arith.constant 0 : index
    %c0_14 = arith.constant 0 : index
    %c0_15 = arith.constant 0 : index
    %35 = vector.load %arg5[%c0_13, %c0_14, %c0_15] : memref<8x2x32xf32, #tpu.memory_space<vmem>>, vector<1x2x32xf32>
    %36 = vector.shape_cast %35 : vector<1x2x32xf32> to vector<2x32xf32>
    %37 = vector.shape_cast %34 : vector<2x32xf32> to vector<1x2x32xf32>
    tpu.vector_store %arg5[%c0_13, %c0_14, %c0_15], %37 {strides = array<i32>} : memref<8x2x32xf32, #tpu.memory_space<vmem>>, vector<1x2x32xf32>,
    %38 = vector.extract_strided_slice %6 {offsets = [2, 0], sizes = [2, 96], strides = [1, 1]} : vector<16x96xf32> to vector<2x96xf32>
    %39 = arith.truncf %34 : vector<2x32xf32> to vector<2x32xbf16>
    %cst_16 = arith.constant dense<0.000000e+00> : vector<2x96xf32>
    %40 = tpu.matmul %39, %7, %cst_16 {dimension_numbers = #tpu.dot_dimension_numbers<[1], [0], [0], [1], [0, 0, 1, 1], [], []>} : vector<2x32xbf16>, vector<32x96xbf16>, vector<2x96xf32> -> vector<2x96xf32>
    %41 = vector.broadcast %8 : vector<1x96xf32> to vector<2x96xf32>
    %42 = arith.addf %40, %41 : vector<2x96xf32>
    %43 = vector.extract_strided_slice %38 {offsets = [0, 0], sizes = [2, 64], strides = [1, 1]} : vector<2x96xf32> to vector<2x64xf32>
    %44 = vector.extract_strided_slice %42 {offsets = [0, 0], sizes = [2, 64], strides = [1, 1]} : vector<2x96xf32> to vector<2x64xf32>
    %45 = arith.addf %43, %44 : vector<2x64xf32>
    %46 = arith.negf %45 : vector<2x64xf32>
    %47 = math.exp %46 : vector<2x64xf32>
    %cst_17 = arith.constant 1.000000e+00 : f32
    %48 = vector.broadcast %cst_17 : f32 to vector<2x64xf32>
    %49 = arith.addf %48, %47 : vector<2x64xf32>
    %50 = arith.divf %48, %49 : vector<2x64xf32>
    %51 = vector.extract_strided_slice %50 {offsets = [0, 0], sizes = [2, 32], strides = [1, 1]} : vector<2x64xf32> to vector<2x32xf32>
    %52 = vector.extract_strided_slice %50 {offsets = [0, 32], sizes = [2, 32], strides = [1, 1]} : vector<2x64xf32> to vector<2x32xf32>
    %53 = vector.extract_strided_slice %38 {offsets = [0, 64], sizes = [2, 32], strides = [1, 1]} : vector<2x96xf32> to vector<2x32xf32>
    %54 = vector.extract_strided_slice %42 {offsets = [0, 64], sizes = [2, 32], strides = [1, 1]} : vector<2x96xf32> to vector<2x32xf32>
    %55 = arith.mulf %51, %54 : vector<2x32xf32>
    %56 = arith.addf %53, %55 : vector<2x32xf32>
    %57 = math.tanh %56 : vector<2x32xf32>
    %cst_18 = arith.constant 1.000000e+00 : f32
    %58 = vector.broadcast %cst_18 : f32 to vector<2x32xf32>
    %59 = arith.subf %58, %52 : vector<2x32xf32>
    %60 = arith.mulf %59, %57 : vector<2x32xf32>
    %61 = arith.mulf %52, %34 : vector<2x32xf32>
    %62 = arith.addf %60, %61 : vector<2x32xf32>
    %c1 = arith.constant 1 : index
    %c0_19 = arith.constant 0 : index
    %c0_20 = arith.constant 0 : index
    %63 = vector.load %arg5[%c1, %c0_19, %c0_20] : memref<8x2x32xf32, #tpu.memory_space<vmem>>, vector<1x2x32xf32>
    %64 = vector.shape_cast %63 : vector<1x2x32xf32> to vector<2x32xf32>
    %65 = vector.shape_cast %62 : vector<2x32xf32> to vector<1x2x32xf32>
    tpu.vector_store %arg5[%c1, %c0_19, %c0_20], %65 {strides = array<i32>} : memref<8x2x32xf32, #tpu.memory_space<vmem>>, vector<1x2x32xf32>,
    %66 = vector.extract_strided_slice %6 {offsets = [4, 0], sizes = [2, 96], strides = [1, 1]} : vector<16x96xf32> to vector<2x96xf32>
    %67 = arith.truncf %62 : vector<2x32xf32> to vector<2x32xbf16>
    %cst_21 = arith.constant dense<0.000000e+00> : vector<2x96xf32>
    %68 = tpu.matmul %67, %7, %cst_21 {dimension_numbers = #tpu.dot_dimension_numbers<[1], [0], [0], [1], [0, 0, 1, 1], [], []>} : vector<2x32xbf16>, vector<32x96xbf16>, vector<2x96xf32> -> vector<2x96xf32>
    %69 = vector.broadcast %8 : vector<1x96xf32> to vector<2x96xf32>
    %70 = arith.addf %68, %69 : vector<2x96xf32>
    %71 = vector.extract_strided_slice %66 {offsets = [0, 0], sizes = [2, 64], strides = [1, 1]} : vector<2x96xf32> to vector<2x64xf32>
    %72 = vector.extract_strided_slice %70 {offsets = [0, 0], sizes = [2, 64], strides = [1, 1]} : vector<2x96xf32> to vector<2x64xf32>
    %73 = arith.addf %71, %72 : vector<2x64xf32>
    %74 = arith.negf %73 : vector<2x64xf32>
    %75 = math.exp %74 : vector<2x64xf32>
    %cst_22 = arith.constant 1.000000e+00 : f32
    %76 = vector.broadcast %cst_22 : f32 to vector<2x64xf32>
    %77 = arith.addf %76, %75 : vector<2x64xf32>
    %78 = arith.divf %76, %77 : vector<2x64xf32>
    %79 = vector.extract_strided_slice %78 {offsets = [0, 0], sizes = [2, 32], strides = [1, 1]} : vector<2x64xf32> to vector<2x32xf32>
    %80 = vector.extract_strided_slice %78 {offsets = [0, 32], sizes = [2, 32], strides = [1, 1]} : vector<2x64xf32> to vector<2x32xf32>
    %81 = vector.extract_strided_slice %66 {offsets = [0, 64], sizes = [2, 32], strides = [1, 1]} : vector<2x96xf32> to vector<2x32xf32>
    %82 = vector.extract_strided_slice %70 {offsets = [0, 64], sizes = [2, 32], strides = [1, 1]} : vector<2x96xf32> to vector<2x32xf32>
    %83 = arith.mulf %79, %82 : vector<2x32xf32>
    %84 = arith.addf %81, %83 : vector<2x32xf32>
    %85 = math.tanh %84 : vector<2x32xf32>
    %cst_23 = arith.constant 1.000000e+00 : f32
    %86 = vector.broadcast %cst_23 : f32 to vector<2x32xf32>
    %87 = arith.subf %86, %80 : vector<2x32xf32>
    %88 = arith.mulf %87, %85 : vector<2x32xf32>
    %89 = arith.mulf %80, %62 : vector<2x32xf32>
    %90 = arith.addf %88, %89 : vector<2x32xf32>
    %c2 = arith.constant 2 : index
    %c0_24 = arith.constant 0 : index
    %c0_25 = arith.constant 0 : index
    %91 = vector.load %arg5[%c2, %c0_24, %c0_25] : memref<8x2x32xf32, #tpu.memory_space<vmem>>, vector<1x2x32xf32>
    %92 = vector.shape_cast %91 : vector<1x2x32xf32> to vector<2x32xf32>
    %93 = vector.shape_cast %90 : vector<2x32xf32> to vector<1x2x32xf32>
    tpu.vector_store %arg5[%c2, %c0_24, %c0_25], %93 {strides = array<i32>} : memref<8x2x32xf32, #tpu.memory_space<vmem>>, vector<1x2x32xf32>,
    %94 = vector.extract_strided_slice %6 {offsets = [6, 0], sizes = [2, 96], strides = [1, 1]} : vector<16x96xf32> to vector<2x96xf32>
    %95 = arith.truncf %90 : vector<2x32xf32> to vector<2x32xbf16>
    %cst_26 = arith.constant dense<0.000000e+00> : vector<2x96xf32>
    %96 = tpu.matmul %95, %7, %cst_26 {dimension_numbers = #tpu.dot_dimension_numbers<[1], [0], [0], [1], [0, 0, 1, 1], [], []>} : vector<2x32xbf16>, vector<32x96xbf16>, vector<2x96xf32> -> vector<2x96xf32>
    %97 = vector.broadcast %8 : vector<1x96xf32> to vector<2x96xf32>
    %98 = arith.addf %96, %97 : vector<2x96xf32>
    %99 = vector.extract_strided_slice %94 {offsets = [0, 0], sizes = [2, 64], strides = [1, 1]} : vector<2x96xf32> to vector<2x64xf32>
    %100 = vector.extract_strided_slice %98 {offsets = [0, 0], sizes = [2, 64], strides = [1, 1]} : vector<2x96xf32> to vector<2x64xf32>
    %101 = arith.addf %99, %100 : vector<2x64xf32>
    %102 = arith.negf %101 : vector<2x64xf32>
    %103 = math.exp %102 : vector<2x64xf32>
    %cst_27 = arith.constant 1.000000e+00 : f32
    %104 = vector.broadcast %cst_27 : f32 to vector<2x64xf32>
    %105 = arith.addf %104, %103 : vector<2x64xf32>
    %106 = arith.divf %104, %105 : vector<2x64xf32>
    %107 = vector.extract_strided_slice %106 {offsets = [0, 0], sizes = [2, 32], strides = [1, 1]} : vector<2x64xf32> to vector<2x32xf32>
    %108 = vector.extract_strided_slice %106 {offsets = [0, 32], sizes = [2, 32], strides = [1, 1]} : vector<2x64xf32> to vector<2x32xf32>
    %109 = vector.extract_strided_slice %94 {offsets = [0, 64], sizes = [2, 32], strides = [1, 1]} : vector<2x96xf32> to vector<2x32xf32>
    %110 = vector.extract_strided_slice %98 {offsets = [0, 64], sizes = [2, 32], strides = [1, 1]} : vector<2x96xf32> to vector<2x32xf32>
    %111 = arith.mulf %107, %110 : vector<2x32xf32>
    %112 = arith.addf %109, %111 : vector<2x32xf32>
    %113 = math.tanh %112 : vector<2x32xf32>
    %cst_28 = arith.constant 1.000000e+00 : f32
    %114 = vector.broadcast %cst_28 : f32 to vector<2x32xf32>
    %115 = arith.subf %114, %108 : vector<2x32xf32>
    %116 = arith.mulf %115, %113 : vector<2x32xf32>
    %117 = arith.mulf %108, %90 : vector<2x32xf32>
    %118 = arith.addf %116, %117 : vector<2x32xf32>
    %c3 = arith.constant 3 : index
    %c0_29 = arith.constant 0 : index
    %c0_30 = arith.constant 0 : index
    %119 = vector.load %arg5[%c3, %c0_29, %c0_30] : memref<8x2x32xf32, #tpu.memory_space<vmem>>, vector<1x2x32xf32>
    %120 = vector.shape_cast %119 : vector<1x2x32xf32> to vector<2x32xf32>
    %121 = vector.shape_cast %118 : vector<2x32xf32> to vector<1x2x32xf32>
    tpu.vector_store %arg5[%c3, %c0_29, %c0_30], %121 {strides = array<i32>} : memref<8x2x32xf32, #tpu.memory_space<vmem>>, vector<1x2x32xf32>,
    %122 = vector.extract_strided_slice %6 {offsets = [8, 0], sizes = [2, 96], strides = [1, 1]} : vector<16x96xf32> to vector<2x96xf32>
    %123 = arith.truncf %118 : vector<2x32xf32> to vector<2x32xbf16>
    %cst_31 = arith.constant dense<0.000000e+00> : vector<2x96xf32>
    %124 = tpu.matmul %123, %7, %cst_31 {dimension_numbers = #tpu.dot_dimension_numbers<[1], [0], [0], [1], [0, 0, 1, 1], [], []>} : vector<2x32xbf16>, vector<32x96xbf16>, vector<2x96xf32> -> vector<2x96xf32>
    %125 = vector.broadcast %8 : vector<1x96xf32> to vector<2x96xf32>
    %126 = arith.addf %124, %125 : vector<2x96xf32>
    %127 = vector.extract_strided_slice %122 {offsets = [0, 0], sizes = [2, 64], strides = [1, 1]} : vector<2x96xf32> to vector<2x64xf32>
    %128 = vector.extract_strided_slice %126 {offsets = [0, 0], sizes = [2, 64], strides = [1, 1]} : vector<2x96xf32> to vector<2x64xf32>
    %129 = arith.addf %127, %128 : vector<2x64xf32>
    %130 = arith.negf %129 : vector<2x64xf32>
    %131 = math.exp %130 : vector<2x64xf32>
    %cst_32 = arith.constant 1.000000e+00 : f32
    %132 = vector.broadcast %cst_32 : f32 to vector<2x64xf32>
    %133 = arith.addf %132, %131 : vector<2x64xf32>
    %134 = arith.divf %132, %133 : vector<2x64xf32>
    %135 = vector.extract_strided_slice %134 {offsets = [0, 0], sizes = [2, 32], strides = [1, 1]} : vector<2x64xf32> to vector<2x32xf32>
    %136 = vector.extract_strided_slice %134 {offsets = [0, 32], sizes = [2, 32], strides = [1, 1]} : vector<2x64xf32> to vector<2x32xf32>
    %137 = vector.extract_strided_slice %122 {offsets = [0, 64], sizes = [2, 32], strides = [1, 1]} : vector<2x96xf32> to vector<2x32xf32>
    %138 = vector.extract_strided_slice %126 {offsets = [0, 64], sizes = [2, 32], strides = [1, 1]} : vector<2x96xf32> to vector<2x32xf32>
    %139 = arith.mulf %135, %138 : vector<2x32xf32>
    %140 = arith.addf %137, %139 : vector<2x32xf32>
    %141 = math.tanh %140 : vector<2x32xf32>
    %cst_33 = arith.constant 1.000000e+00 : f32
    %142 = vector.broadcast %cst_33 : f32 to vector<2x32xf32>
    %143 = arith.subf %142, %136 : vector<2x32xf32>
    %144 = arith.mulf %143, %141 : vector<2x32xf32>
    %145 = arith.mulf %136, %118 : vector<2x32xf32>
    %146 = arith.addf %144, %145 : vector<2x32xf32>
    %c4 = arith.constant 4 : index
    %c0_34 = arith.constant 0 : index
    %c0_35 = arith.constant 0 : index
    %147 = vector.load %arg5[%c4, %c0_34, %c0_35] : memref<8x2x32xf32, #tpu.memory_space<vmem>>, vector<1x2x32xf32>
    %148 = vector.shape_cast %147 : vector<1x2x32xf32> to vector<2x32xf32>
    %149 = vector.shape_cast %146 : vector<2x32xf32> to vector<1x2x32xf32>
    tpu.vector_store %arg5[%c4, %c0_34, %c0_35], %149 {strides = array<i32>} : memref<8x2x32xf32, #tpu.memory_space<vmem>>, vector<1x2x32xf32>,
    %150 = vector.extract_strided_slice %6 {offsets = [10, 0], sizes = [2, 96], strides = [1, 1]} : vector<16x96xf32> to vector<2x96xf32>
    %151 = arith.truncf %146 : vector<2x32xf32> to vector<2x32xbf16>
    %cst_36 = arith.constant dense<0.000000e+00> : vector<2x96xf32>
    %152 = tpu.matmul %151, %7, %cst_36 {dimension_numbers = #tpu.dot_dimension_numbers<[1], [0], [0], [1], [0, 0, 1, 1], [], []>} : vector<2x32xbf16>, vector<32x96xbf16>, vector<2x96xf32> -> vector<2x96xf32>
    %153 = vector.broadcast %8 : vector<1x96xf32> to vector<2x96xf32>
    %154 = arith.addf %152, %153 : vector<2x96xf32>
    %155 = vector.extract_strided_slice %150 {offsets = [0, 0], sizes = [2, 64], strides = [1, 1]} : vector<2x96xf32> to vector<2x64xf32>
    %156 = vector.extract_strided_slice %154 {offsets = [0, 0], sizes = [2, 64], strides = [1, 1]} : vector<2x96xf32> to vector<2x64xf32>
    %157 = arith.addf %155, %156 : vector<2x64xf32>
    %158 = arith.negf %157 : vector<2x64xf32>
    %159 = math.exp %158 : vector<2x64xf32>
    %cst_37 = arith.constant 1.000000e+00 : f32
    %160 = vector.broadcast %cst_37 : f32 to vector<2x64xf32>
    %161 = arith.addf %160, %159 : vector<2x64xf32>
    %162 = arith.divf %160, %161 : vector<2x64xf32>
    %163 = vector.extract_strided_slice %162 {offsets = [0, 0], sizes = [2, 32], strides = [1, 1]} : vector<2x64xf32> to vector<2x32xf32>
    %164 = vector.extract_strided_slice %162 {offsets = [0, 32], sizes = [2, 32], strides = [1, 1]} : vector<2x64xf32> to vector<2x32xf32>
    %165 = vector.extract_strided_slice %150 {offsets = [0, 64], sizes = [2, 32], strides = [1, 1]} : vector<2x96xf32> to vector<2x32xf32>
    %166 = vector.extract_strided_slice %154 {offsets = [0, 64], sizes = [2, 32], strides = [1, 1]} : vector<2x96xf32> to vector<2x32xf32>
    %167 = arith.mulf %163, %166 : vector<2x32xf32>
    %168 = arith.addf %165, %167 : vector<2x32xf32>
    %169 = math.tanh %168 : vector<2x32xf32>
    %cst_38 = arith.constant 1.000000e+00 : f32
    %170 = vector.broadcast %cst_38 : f32 to vector<2x32xf32>
    %171 = arith.subf %170, %164 : vector<2x32xf32>
    %172 = arith.mulf %171, %169 : vector<2x32xf32>
    %173 = arith.mulf %164, %146 : vector<2x32xf32>
    %174 = arith.addf %172, %173 : vector<2x32xf32>
    %c5 = arith.constant 5 : index
    %c0_39 = arith.constant 0 : index
    %c0_40 = arith.constant 0 : index
    %175 = vector.load %arg5[%c5, %c0_39, %c0_40] : memref<8x2x32xf32, #tpu.memory_space<vmem>>, vector<1x2x32xf32>
    %176 = vector.shape_cast %175 : vector<1x2x32xf32> to vector<2x32xf32>
    %177 = vector.shape_cast %174 : vector<2x32xf32> to vector<1x2x32xf32>
    tpu.vector_store %arg5[%c5, %c0_39, %c0_40], %177 {strides = array<i32>} : memref<8x2x32xf32, #tpu.memory_space<vmem>>, vector<1x2x32xf32>,
    %178 = vector.extract_strided_slice %6 {offsets = [12, 0], sizes = [2, 96], strides = [1, 1]} : vector<16x96xf32> to vector<2x96xf32>
    %179 = arith.truncf %174 : vector<2x32xf32> to vector<2x32xbf16>
    %cst_41 = arith.constant dense<0.000000e+00> : vector<2x96xf32>
    %180 = tpu.matmul %179, %7, %cst_41 {dimension_numbers = #tpu.dot_dimension_numbers<[1], [0], [0], [1], [0, 0, 1, 1], [], []>} : vector<2x32xbf16>, vector<32x96xbf16>, vector<2x96xf32> -> vector<2x96xf32>
    %181 = vector.broadcast %8 : vector<1x96xf32> to vector<2x96xf32>
    %182 = arith.addf %180, %181 : vector<2x96xf32>
    %183 = vector.extract_strided_slice %178 {offsets = [0, 0], sizes = [2, 64], strides = [1, 1]} : vector<2x96xf32> to vector<2x64xf32>
    %184 = vector.extract_strided_slice %182 {offsets = [0, 0], sizes = [2, 64], strides = [1, 1]} : vector<2x96xf32> to vector<2x64xf32>
    %185 = arith.addf %183, %184 : vector<2x64xf32>
    %186 = arith.negf %185 : vector<2x64xf32>
    %187 = math.exp %186 : vector<2x64xf32>
    %cst_42 = arith.constant 1.000000e+00 : f32
    %188 = vector.broadcast %cst_42 : f32 to vector<2x64xf32>
    %189 = arith.addf %188, %187 : vector<2x64xf32>
    %190 = arith.divf %188, %189 : vector<2x64xf32>
    %191 = vector.extract_strided_slice %190 {offsets = [0, 0], sizes = [2, 32], strides = [1, 1]} : vector<2x64xf32> to vector<2x32xf32>
    %192 = vector.extract_strided_slice %190 {offsets = [0, 32], sizes = [2, 32], strides = [1, 1]} : vector<2x64xf32> to vector<2x32xf32>
    %193 = vector.extract_strided_slice %178 {offsets = [0, 64], sizes = [2, 32], strides = [1, 1]} : vector<2x96xf32> to vector<2x32xf32>
    %194 = vector.extract_strided_slice %182 {offsets = [0, 64], sizes = [2, 32], strides = [1, 1]} : vector<2x96xf32> to vector<2x32xf32>
    %195 = arith.mulf %191, %194 : vector<2x32xf32>
    %196 = arith.addf %193, %195 : vector<2x32xf32>
    %197 = math.tanh %196 : vector<2x32xf32>
    %cst_43 = arith.constant 1.000000e+00 : f32
    %198 = vector.broadcast %cst_43 : f32 to vector<2x32xf32>
    %199 = arith.subf %198, %192 : vector<2x32xf32>
    %200 = arith.mulf %199, %197 : vector<2x32xf32>
    %201 = arith.mulf %192, %174 : vector<2x32xf32>
    %202 = arith.addf %200, %201 : vector<2x32xf32>
    %c6 = arith.constant 6 : index
    %c0_44 = arith.constant 0 : index
    %c0_45 = arith.constant 0 : index
    %203 = vector.load %arg5[%c6, %c0_44, %c0_45] : memref<8x2x32xf32, #tpu.memory_space<vmem>>, vector<1x2x32xf32>
    %204 = vector.shape_cast %203 : vector<1x2x32xf32> to vector<2x32xf32>
    %205 = vector.shape_cast %202 : vector<2x32xf32> to vector<1x2x32xf32>
    tpu.vector_store %arg5[%c6, %c0_44, %c0_45], %205 {strides = array<i32>} : memref<8x2x32xf32, #tpu.memory_space<vmem>>, vector<1x2x32xf32>,
    %206 = vector.extract_strided_slice %6 {offsets = [14, 0], sizes = [2, 96], strides = [1, 1]} : vector<16x96xf32> to vector<2x96xf32>
    %207 = arith.truncf %202 : vector<2x32xf32> to vector<2x32xbf16>
    %cst_46 = arith.constant dense<0.000000e+00> : vector<2x96xf32>
    %208 = tpu.matmul %207, %7, %cst_46 {dimension_numbers = #tpu.dot_dimension_numbers<[1], [0], [0], [1], [0, 0, 1, 1], [], []>} : vector<2x32xbf16>, vector<32x96xbf16>, vector<2x96xf32> -> vector<2x96xf32>
    %209 = vector.broadcast %8 : vector<1x96xf32> to vector<2x96xf32>
    %210 = arith.addf %208, %209 : vector<2x96xf32>
    %211 = vector.extract_strided_slice %206 {offsets = [0, 0], sizes = [2, 64], strides = [1, 1]} : vector<2x96xf32> to vector<2x64xf32>
    %212 = vector.extract_strided_slice %210 {offsets = [0, 0], sizes = [2, 64], strides = [1, 1]} : vector<2x96xf32> to vector<2x64xf32>
    %213 = arith.addf %211, %212 : vector<2x64xf32>
    %214 = arith.negf %213 : vector<2x64xf32>
    %215 = math.exp %214 : vector<2x64xf32>
    %cst_47 = arith.constant 1.000000e+00 : f32
    %216 = vector.broadcast %cst_47 : f32 to vector<2x64xf32>
    %217 = arith.addf %216, %215 : vector<2x64xf32>
    %218 = arith.divf %216, %217 : vector<2x64xf32>
    %219 = vector.extract_strided_slice %218 {offsets = [0, 0], sizes = [2, 32], strides = [1, 1]} : vector<2x64xf32> to vector<2x32xf32>
    %220 = vector.extract_strided_slice %218 {offsets = [0, 32], sizes = [2, 32], strides = [1, 1]} : vector<2x64xf32> to vector<2x32xf32>
    %221 = vector.extract_strided_slice %206 {offsets = [0, 64], sizes = [2, 32], strides = [1, 1]} : vector<2x96xf32> to vector<2x32xf32>
    %222 = vector.extract_strided_slice %210 {offsets = [0, 64], sizes = [2, 32], strides = [1, 1]} : vector<2x96xf32> to vector<2x32xf32>
    %223 = arith.mulf %219, %222 : vector<2x32xf32>
    %224 = arith.addf %221, %223 : vector<2x32xf32>
    %225 = math.tanh %224 : vector<2x32xf32>
    %cst_48 = arith.constant 1.000000e+00 : f32
    %226 = vector.broadcast %cst_48 : f32 to vector<2x32xf32>
    %227 = arith.subf %226, %220 : vector<2x32xf32>
    %228 = arith.mulf %227, %225 : vector<2x32xf32>
    %229 = arith.mulf %220, %202 : vector<2x32xf32>
    %230 = arith.addf %228, %229 : vector<2x32xf32>
    %c7 = arith.constant 7 : index
    %c0_49 = arith.constant 0 : index
    %c0_50 = arith.constant 0 : index
    %231 = vector.load %arg5[%c7, %c0_49, %c0_50] : memref<8x2x32xf32, #tpu.memory_space<vmem>>, vector<1x2x32xf32>
    %232 = vector.shape_cast %231 : vector<1x2x32xf32> to vector<2x32xf32>
    %233 = vector.shape_cast %230 : vector<2x32xf32> to vector<1x2x32xf32>
    tpu.vector_store %arg5[%c7, %c0_49, %c0_50], %233 {strides = array<i32>} : memref<8x2x32xf32, #tpu.memory_space<vmem>>, vector<1x2x32xf32>,
    %c0_51 = arith.constant 0 : index
    %c0_52 = arith.constant 0 : index
    %c0_53 = arith.constant 0 : index
    %234 = vector.load %arg6[%c0_51, %c0_52, %c0_53] : memref<1x2x32xf32, #tpu.memory_space<vmem>>, vector<1x2x32xf32>
    %235 = vector.shape_cast %234 : vector<1x2x32xf32> to vector<2x32xf32>
    %236 = vector.shape_cast %230 : vector<2x32xf32> to vector<1x2x32xf32>
    tpu.vector_store %arg6[%c0_51, %c0_52, %c0_53], %236 {strides = array<i32>} : memref<1x2x32xf32, #tpu.memory_space<vmem>>, vector<1x2x32xf32>,
    return
  }
}

</mosaic_0001>

<llo_original>
// kernel: encoder_forward.1
$region0: #{encoder_forward.1}
  #allocation0 [shape = 'u32[]', space=smem, size = 0x4, offset = 0x4, fixed_abs, tag = 'smem constant byte address 0x4 - core index']
  #allocation1 [shape = 'u32[72,128]{1,0:T(1,128)}', space=vmem, size = 0x9000, scoped, tag = 'internal scratch']
  %s0 = inlined_call_operand.vmem [shape: f32[16,64], index: 0, kind: input, shape index: {}]
  %s1 = inlined_call_operand.vmem [shape: bf16[64,96], index: 1, kind: input, shape index: {}]
  %s2 = inlined_call_operand.vmem [shape: f32[1,96], index: 2, kind: input, shape index: {}]
  %s3 = inlined_call_operand.hbm [shape: bf16[32,96], index: 3, kind: input, shape index: {}]
  %s4 = inlined_call_operand.vmem [shape: f32[1,96], index: 4, kind: input, shape index: {}]
  %s5 = inlined_call_operand.vmem [shape: f32[8,2,32], index: 5, kind: output, shape index: {0}]
  %s6 = inlined_call_operand.hbm [shape: f32[1,2,32], index: 6, kind: output, shape index: {1}]
  %7 = xla_tuple %s5, %s6
  %s8 = sld [smem:[#allocation0]]
  $region42: #{encoder_forward.1} parent=0
    _
  %s10 = ssub.s32 1, %s8
  %s11 = scalar_select 0, %s10, %s8
  $region1: #{encoder_forward.1} parent=0
    #allocation2 [shape = 'u8[8192]{0}', space=vmem, size = 0x2000, scoped, tag = 'input window, operand 3, single buffered']
    #allocation3 [shape = 's32[1]{0}', space=sflag, size = 0x4, scoped, tag = 'scoped memory for encoder_forward.1']
    #allocation4 [shape = 's32[1]{0}', space=sflag, size = 0x4, scoped, tag = 'scoped memory for encoder_forward.1']
    #allocation5 [shape = 'u8[1024]{0}', space=vmem, size = 0x400, scoped, tag = 'output window, operand 1, single buffered']
    %12 = vsyncpa [#allocation3], 0
    %13 = vsyncpa [#allocation4], 0
    // Predicated region
    $region2: #{encoder_forward.1} parent=1 // pred_check
      _
    $region3: #{encoder_forward.1} parent=1 // pred_check_branch
      %15 = sbr.rel (0) target = $region5
    $region4: #{encoder_forward.1} parent=1 // pred_region
      _
    $region5: #{encoder_forward.1} parent=1 // pred_fallthru
      _
    // Predicated region
    $region6: #{encoder_forward.1} parent=1 // pred_check
      _
    $region7: #{encoder_forward.1} parent=1 // pred_check_branch
      %17 = sbr.rel (0) target = $region9
    $region8: #{encoder_forward.1} parent=1 // pred_region
      _
    $region9: #{encoder_forward.1} parent=1 // pred_fallthru
      _
    // Predicated region
    $region10: #{encoder_forward.1} parent=1 // pred_check
      _
    $region11: #{encoder_forward.1} parent=1 // pred_check_branch
      %19 = sbr.rel (0) target = $region13
    $region12: #{encoder_forward.1} parent=1 // pred_region
      _
    $region13: #{encoder_forward.1} parent=1 // pred_fallthru
      _
    // Predicated region
    $region14: #{encoder_forward.1} parent=1 // pred_check
      _
    $region15: #{encoder_forward.1} parent=1 // pred_check_branch
      %21 = sbr.rel (0) target = $region17
    $region16: #{encoder_forward.1} parent=1 // pred_region
      %23 = vsyncadd [#allocation3], 0
      %s24 = sshll.u32 %s3, 4
      %s25 = int_to_ptr.hbm [resolvable:$true] %s24
      %s26 = sshll.u32 [#allocation2], 4
      %s27 = int_to_ptr.vmem [resolvable:$true] %s26
      %32 = dma.hbm_to_vmem [thread:$0]  %s25, 256, %s27, [#allocation3], 64, 64, 4
    $region17: #{encoder_forward.1} parent=1 // pred_fallthru
      _
    // Predicated region
    $region18: #{encoder_forward.1} parent=1 // pred_check
      _
    $region19: #{encoder_forward.1} parent=1 // pred_check_branch
      %34 = sbr.rel (0) target = $region21
    $region20: #{encoder_forward.1} parent=1 // pred_region
      _
    $region21: #{encoder_forward.1} parent=1 // pred_fallthru
      _
    // Predicated region
    $region22: #{encoder_forward.1} parent=1 // pred_check
      _
    $region23: #{encoder_forward.1} parent=1 // pred_check_branch
      %36 = sbr.rel (0) target = $region25
    $region24: #{encoder_forward.1} parent=1 // pred_region
      %38 = dma.done [#allocation3], 256
    $region25: #{encoder_forward.1} parent=1 // pred_fallthru
      _
    %v40 = vld [vmem:[%s0] sm:$0xff]
    %v41 = vld [vmem:[%s0 + $0x8] sm:$0xff]
    %v42 = vpack.c.bf16 %v41, %v40
    %v43 = vld [vmem:[%s1] sm:$0xf]
    %v44 = vld [vmem:[%s1 + $0x4] sm:$0xf]
    %v45 = vld [vmem:[%s1 + $0x8] sm:$0xf]
    %v46 = vld [vmem:[%s1 + $0xc] sm:$0xf]
    %v47 = vld [vmem:[%s1 + $0x10] sm:$0xf]
    %v48 = vld [vmem:[%s1 + $0x14] sm:$0xf]
    %v49 = vld [vmem:[%s1 + $0x18] sm:$0xf]
    %v50 = vld [vmem:[%s1 + $0x1c] sm:$0xf]
    %v51 = vld [vmem:[%s2] sm:$0x1]
    %v53 = vperm.slane %v51, 0
    %v63 = vunpack.c.l.b16 %v43
    %v64 = vunpack.c.l.b16 %v44
    %v65 = vunpack.c.l.b16 %v45
    %v66 = vunpack.c.l.b16 %v46
    %v67 = vunpack.c.l.b16 %v47
    %v68 = vunpack.c.l.b16 %v48
    %v69 = vunpack.c.l.b16 %v49
    %v70 = vunpack.c.l.b16 %v50
    %v71 = vpack.c.b16 %v64, %v63
    %v72 = vpack.c.b16 %v66, %v65
    %v73 = vpack.c.b16 %v68, %v67
    %v74 = vpack.c.b16 %v70, %v69
    %vm79 = vcmask 523264
    %v81 = vsel %vm79, %v42, 0
    %83 = vmatpush.bf16.msra.mxu0 0
    %84 = vmatpush.bf16.msra.mxu0 0
    %85 = vmatpush.bf16.msra.mxu0 0
    %86 = vmatpush.bf16.msra.mxu0 0
    %87 = vmatpush.bf16.msra.mxu0 %v74
    %88 = vmatpush.bf16.msra.mxu0 %v73
    %89 = vmatpush.bf16.msra.mxu0 %v72
    %90 = vmatpush.bf16.msra.mxu0 %v71
    %91 = vmatmul.bf16.gmra.mxu0 %v81
    %v92 = vpop.f32.mrf.mxu0
    %v93 = vadd.f32 %v53, %v92
    %v94 = vpop.f32.mrf.mxu0
    %v95 = vadd.f32 %v53, %v94
    %96 = vdwg.mxu0
    %v97 = vld [vmem:[#allocation2] sm:$0xf]
    %v98 = vld [vmem:[#allocation2 + $0x4] sm:$0xf]
    %v99 = vld [vmem:[#allocation2 + $0x8] sm:$0xf]
    %v100 = vld [vmem:[#allocation2 + $0xc] sm:$0xf]
    %v101 = vld [vmem:[%s4] sm:$0x1]
    %v103 = vperm.slane %v101, 0
    %v109 = vunpack.c.l.b16 %v97
    %v110 = vunpack.c.l.b16 %v98
    %v111 = vunpack.c.l.b16 %v99
    %v112 = vunpack.c.l.b16 %v100
    %v113 = vpack.c.b16 %v110, %v109
    %v114 = vpack.c.b16 %v112, %v111
    %vm117 = vcmask 261120
    %v119 = vsel %vm117, 0, 0
    %121 = vmatpush.bf16.msra.mxu0 0
    %122 = vmatpush.bf16.msra.mxu0 0
    %123 = vmatpush.bf16.msra.mxu0 0
    %124 = vmatpush.bf16.msra.mxu0 0
    %125 = vmatpush.bf16.msra.mxu0 0
    %126 = vmatpush.bf16.msra.mxu0 0
    %127 = vmatpush.bf16.msra.mxu0 %v114
    %128 = vmatpush.bf16.msra.mxu0 %v113
    %129 = vmatmul.bf16.gmra.mxu0 %v119
    %v130 = vpop.f32.mrf.mxu0
    %v131 = vadd.f32 %v103, %v130
    %v132 = vpop.f32.mrf.mxu0
    %133 = vdwg.mxu0
    %v134 = vadd.f32 %v93, %v131
    %v135 = vxor.u32 %v134, 2147483648
    %v136 = vmul.f32 %v135, 1.442695
    %v137 = vpow.pop %v136
    %v138 = vadd.f32 %v137, 1.0
    %v139 = vrcp.pop %v138
    %v140 = vmul.f32 %v138, %v139
    %v141 = vsub.f32 1.0, %v140
    %v142 = vmul.f32 %v139, %v141
    %v143 = vadd.f32 %v139, %v142
    %vm144 = vweird.f32 %v138
    %vm145 = vweird.f32 %v139
    %vm146 = vmor %vm144, %vm145
    %v147 = vsel %vm146, %v139, %v143
    %v148 = vand.u32 2147483647, %v138
    %vm149 = vcmp.eq.f32.partialorder %v148, 8.507059e+37
    %v150 = vand.u32 %v138, 2147483648
    %v151 = vor.u32 1.1754944e-38, %v150
    %v152 = vsel %vm149, %v151, %v147
    %v153 = vmul.f32 1.0, %v152
    %155 = vrot.lane.b32.xlu0 %v131, 64
    %v156 = vpop.permute.xlu0 %155
    %v158 = vmul.f32 %v153, %v156
    %160 = vrot.lane.b32.xlu0 %v158, 64
    %v161 = vpop.permute.xlu0 %160
    %v163 = vadd.f32 %v93, %v161
    %v164 = vtanh.pop %v163
    %v165 = vsub.f32 1.0, %v153
    %167 = vrot.lane.b32.xlu0 %v164, 96
    %v168 = vpop.permute.xlu0 %167
    %v170 = vmul.f32 %v165, %v168
    %v171 = vmul.f32 %v153, 0.0
    %v172 = vadd.f32 %v170, %v171
    %174 = vrot.lane.b32.xlu0 %v172, 96
    %v175 = vpop.permute.xlu0 %174
    %vm177 = vcmask 254976
    %178 = vst.msk [vmem:[%s5] sm:$0x3] %vm177, %v175
    %v179 = vpack.c.bf16 %v172, %v172
    %181 = vrot.lane.b32.xlu0 %v179, 96
    %v182 = vpop.permute.xlu0 %181
    %v184 = vsel %vm117, %v182, 0
    %186 = vmatpush.bf16.msra.mxu0 0
    %187 = vmatpush.bf16.msra.mxu0 0
    %188 = vmatpush.bf16.msra.mxu0 0
    %189 = vmatpush.bf16.msra.mxu0 0
    %190 = vmatpush.bf16.msra.mxu0 0
    %191 = vmatpush.bf16.msra.mxu0 0
    %192 = vmatpush.bf16.msra.mxu0 %v114
    %193 = vmatpush.bf16.msra.mxu0 %v113
    %194 = vmatmul.bf16.gmra.mxu0 %v184
    %v195 = vpop.f32.mrf.mxu0
    %v196 = vadd.f32 %v103, %v195
    %v197 = vpop.f32.mrf.mxu0
    %198 = vdwg.mxu0
    %v200 = vrot.slane %v196, 6
    %v202 = vadd.f32 %v93, %v200
    %v203 = vxor.u32 %v202, 2147483648
    %v204 = vmul.f32 %v203, 1.442695
    %v205 = vpow.pop %v204
    %v206 = vadd.f32 %v205, 1.0
    %v207 = vrcp.pop %v206
    %v208 = vmul.f32 %v206, %v207
    %v209 = vsub.f32 1.0, %v208
    %v210 = vmul.f32 %v207, %v209
    %v211 = vadd.f32 %v207, %v210
    %vm212 = vweird.f32 %v206
    %vm213 = vweird.f32 %v207
    %vm214 = vmor %vm212, %vm213
    %v215 = vsel %vm214, %v207, %v211
    %v216 = vand.u32 2147483647, %v206
    %vm217 = vcmp.eq.f32.partialorder %v216, 8.507059e+37
    %v218 = vand.u32 %v206, 2147483648
    %v219 = vor.u32 1.1754944e-38, %v218
    %v220 = vsel %vm217, %v219, %v215
    %v221 = vmul.f32 1.0, %v220
    %222 = vrot.lane.b32.xlu0 %v200, 64
    %v223 = vpop.permute.xlu0 %222
    %v225 = vmul.f32 %v221, %v223
    %227 = vrot.lane.b32.xlu0 %v225, 64
    %v228 = vpop.permute.xlu0 %227
    %v230 = vadd.f32 %v93, %v228
    %v231 = vtanh.pop %v230
    %v232 = vsub.f32 1.0, %v221
    %234 = vrot.lane.b32.xlu0 %v231, 96
    %v235 = vpop.permute.xlu0 %234
    %v237 = vmul.f32 %v232, %v235
    %v238 = vrot.slane %v172, 6
    %v240 = vmul.f32 %v221, %v238
    %v241 = vadd.f32 %v237, %v240
    %243 = vrot.lane.b32.xlu0 %v241, 96
    %v244 = vpop.permute.xlu0 %243
    %s246 = scalar_lea.vmem %s5, 2
    %vm247 = vcmask 257026
    %248 = vst.msk [vmem:[%s246 - $0x2] sm:$0xc] %vm247, %v244
    %v249 = vpack.c.bf16 %v241, %v241
    %v251 = vrot.slane %v249, 1
    %252 = vrot.lane.b32.xlu0 %v251, 96
    %v253 = vpop.permute.xlu0 %252
    %v255 = vsel %vm117, %v253, 0
    %257 = vmatpush.bf16.msra.mxu0 0
    %258 = vmatpush.bf16.msra.mxu0 0
    %259 = vmatpush.bf16.msra.mxu0 0
    %260 = vmatpush.bf16.msra.mxu0 0
    %261 = vmatpush.bf16.msra.mxu0 0
    %262 = vmatpush.bf16.msra.mxu0 0
    %263 = vmatpush.bf16.msra.mxu0 %v114
    %264 = vmatpush.bf16.msra.mxu0 %v113
    %265 = vmatmul.bf16.gmra.mxu0 %v255
    %v266 = vpop.f32.mrf.mxu0
    %v267 = vadd.f32 %v103, %v266
    %v268 = vpop.f32.mrf.mxu0
    %269 = vdwg.mxu0
    %v271 = vrot.slane %v267, 4
    %v273 = vadd.f32 %v93, %v271
    %v274 = vxor.u32 %v273, 2147483648
    %v275 = vmul.f32 %v274, 1.442695
    %v276 = vpow.pop %v275
    %v277 = vadd.f32 %v276, 1.0
    %v278 = vrcp.pop %v277
    %v279 = vmul.f32 %v277, %v278
    %v280 = vsub.f32 1.0, %v279
    %v281 = vmul.f32 %v278, %v280
    %v282 = vadd.f32 %v278, %v281
    %vm283 = vweird.f32 %v277
    %vm284 = vweird.f32 %v278
    %vm285 = vmor %vm283, %vm284
    %v286 = vsel %vm285, %v278, %v282
    %v287 = vand.u32 2147483647, %v277
    %vm288 = vcmp.eq.f32.partialorder %v287, 8.507059e+37
    %v289 = vand.u32 %v277, 2147483648
    %v290 = vor.u32 1.1754944e-38, %v289
    %v291 = vsel %vm288, %v290, %v286
    %v292 = vmul.f32 1.0, %v291
    %293 = vrot.lane.b32.xlu0 %v271, 64
    %v294 = vpop.permute.xlu0 %293
    %v296 = vmul.f32 %v292, %v294
    %298 = vrot.lane.b32.xlu0 %v296, 64
    %v299 = vpop.permute.xlu0 %298
    %v301 = vadd.f32 %v93, %v299
    %v302 = vtanh.pop %v301
    %v303 = vsub.f32 1.0, %v292
    %305 = vrot.lane.b32.xlu0 %v302, 96
    %v306 = vpop.permute.xlu0 %305
    %v308 = vmul.f32 %v303, %v306
    %v309 = vrot.slane %v241, 6
    %v311 = vmul.f32 %v292, %v309
    %v312 = vadd.f32 %v308, %v311
    %314 = vrot.lane.b32.xlu0 %v312, 96
    %v315 = vpop.permute.xlu0 %314
    %s317 = scalar_lea.vmem %s5, 4
    %vm318 = vcmask 259076
    %319 = vst.msk [vmem:[%s317 - $0x4] sm:$0x30] %vm318, %v315
    %v320 = vpack.c.bf16 %v312, %v312
    %v322 = vrot.slane %v320, 2
    %323 = vrot.lane.b32.xlu0 %v322, 96
    %v324 = vpop.permute.xlu0 %323
    %v326 = vsel %vm117, %v324, 0
    %328 = vmatpush.bf16.msra.mxu0 0
    %329 = vmatpush.bf16.msra.mxu0 0
    %330 = vmatpush.bf16.msra.mxu0 0
    %331 = vmatpush.bf16.msra.mxu0 0
    %332 = vmatpush.bf16.msra.mxu0 0
    %333 = vmatpush.bf16.msra.mxu0 0
    %334 = vmatpush.bf16.msra.mxu0 %v114
    %335 = vmatpush.bf16.msra.mxu0 %v113
    %336 = vmatmul.bf16.gmra.mxu0 %v326
    %v337 = vpop.f32.mrf.mxu0
    %v338 = vadd.f32 %v103, %v337
    %v339 = vpop.f32.mrf.mxu0
    %340 = vdwg.mxu0
    %v342 = vrot.slane %v338, 2
    %v344 = vadd.f32 %v93, %v342
    %v345 = vxor.u32 %v344, 2147483648
    %v346 = vmul.f32 %v345, 1.442695
    %v347 = vpow.pop %v346
    %v348 = vadd.f32 %v347, 1.0
    %v349 = vrcp.pop %v348
    %v350 = vmul.f32 %v348, %v349
    %v351 = vsub.f32 1.0, %v350
    %v352 = vmul.f32 %v349, %v351
    %v353 = vadd.f32 %v349, %v352
    %vm354 = vweird.f32 %v348
    %vm355 = vweird.f32 %v349
    %vm356 = vmor %vm354, %vm355
    %v357 = vsel %vm356, %v349, %v353
    %v358 = vand.u32 2147483647, %v348
    %vm359 = vcmp.eq.f32.partialorder %v358, 8.507059e+37
    %v360 = vand.u32 %v348, 2147483648
    %v361 = vor.u32 1.1754944e-38, %v360
    %v362 = vsel %vm359, %v361, %v357
    %v363 = vmul.f32 1.0, %v362
    %364 = vrot.lane.b32.xlu0 %v342, 64
    %v365 = vpop.permute.xlu0 %364
    %v367 = vmul.f32 %v363, %v365
    %369 = vrot.lane.b32.xlu0 %v367, 64
    %v370 = vpop.permute.xlu0 %369
    %v372 = vadd.f32 %v93, %v370
    %v373 = vtanh.pop %v372
    %v374 = vsub.f32 1.0, %v363
    %376 = vrot.lane.b32.xlu0 %v373, 96
    %v377 = vpop.permute.xlu0 %376
    %v379 = vmul.f32 %v374, %v377
    %v380 = vrot.slane %v312, 6
    %v382 = vmul.f32 %v363, %v380
    %v383 = vadd.f32 %v379, %v382
    %385 = vrot.lane.b32.xlu0 %v383, 96
    %v386 = vpop.permute.xlu0 %385
    %s388 = scalar_lea.vmem %s5, 6
    %vm389 = vcmask 261126
    %390 = vst.msk [vmem:[%s388 - $0x6] sm:$0xc0] %vm389, %v386
    %v391 = vpack.c.bf16 %v383, %v383
    %v393 = vrot.slane %v391, 3
    %394 = vrot.lane.b32.xlu0 %v393, 96
    %v395 = vpop.permute.xlu0 %394
    %v397 = vsel %vm117, %v395, 0
    %399 = vmatpush.bf16.msra.mxu0 0
    %400 = vmatpush.bf16.msra.mxu0 0
    %401 = vmatpush.bf16.msra.mxu0 0
    %402 = vmatpush.bf16.msra.mxu0 0
    %403 = vmatpush.bf16.msra.mxu0 0
    %404 = vmatpush.bf16.msra.mxu0 0
    %405 = vmatpush.bf16.msra.mxu0 %v114
    %406 = vmatpush.bf16.msra.mxu0 %v113
    %407 = vmatmul.bf16.gmra.mxu0 %v397
    %v408 = vpop.f32.mrf.mxu0
    %v409 = vadd.f32 %v103, %v408
    %v410 = vpop.f32.mrf.mxu0
    %411 = vdwg.mxu0
    %v412 = vadd.f32 %v95, %v409
    %v413 = vxor.u32 %v412, 2147483648
    %v414 = vmul.f32 %v413, 1.442695
    %v415 = vpow.pop %v414
    %v416 = vadd.f32 %v415, 1.0
    %v417 = vrcp.pop %v416
    %v418 = vmul.f32 %v416, %v417
    %v419 = vsub.f32 1.0, %v418
    %v420 = vmul.f32 %v417, %v419
    %v421 = vadd.f32 %v417, %v420
    %vm422 = vweird.f32 %v416
    %vm423 = vweird.f32 %v417
    %vm424 = vmor %vm422, %vm423
    %v425 = vsel %vm424, %v417, %v421
    %v426 = vand.u32 2147483647, %v416
    %vm427 = vcmp.eq.f32.partialorder %v426, 8.507059e+37
    %v428 = vand.u32 %v416, 2147483648
    %v429 = vor.u32 1.1754944e-38, %v428
    %v430 = vsel %vm427, %v429, %v425
    %v431 = vmul.f32 1.0, %v430
    %433 = vrot.lane.b32.xlu0 %v409, 64
    %v434 = vpop.permute.xlu0 %433
    %v436 = vmul.f32 %v431, %v434
    %438 = vrot.lane.b32.xlu0 %v436, 64
    %v439 = vpop.permute.xlu0 %438
    %v441 = vadd.f32 %v95, %v439
    %v442 = vtanh.pop %v441
    %v443 = vsub.f32 1.0, %v431
    %445 = vrot.lane.b32.xlu0 %v442, 96
    %v446 = vpop.permute.xlu0 %445
    %v448 = vmul.f32 %v443, %v446
    %v449 = vrot.slane %v383, 6
    %v451 = vmul.f32 %v431, %v449
    %v452 = vadd.f32 %v448, %v451
    %454 = vrot.lane.b32.xlu0 %v452, 96
    %v455 = vpop.permute.xlu0 %454
    %s457 = scalar_lea.vmem %s5, 8
    %458 = vst.msk [vmem:[%s457] sm:$0x3] %vm177, %v455
    %v459 = vpack.c.bf16 %v452, %v452
    %461 = vrot.lane.b32.xlu0 %v459, 96
    %v462 = vpop.permute.xlu0 %461
    %v464 = vsel %vm117, %v462, 0
    %466 = vmatpush.bf16.msra.mxu0 0
    %467 = vmatpush.bf16.msra.mxu0 0
    %468 = vmatpush.bf16.msra.mxu0 0
    %469 = vmatpush.bf16.msra.mxu0 0
    %470 = vmatpush.bf16.msra.mxu0 0
    %471 = vmatpush.bf16.msra.mxu0 0
    %472 = vmatpush.bf16.msra.mxu0 %v114
    %473 = vmatpush.bf16.msra.mxu0 %v113
    %474 = vmatmul.bf16.gmra.mxu0 %v464
    %v475 = vpop.f32.mrf.mxu0
    %v476 = vadd.f32 %v103, %v475
    %v477 = vpop.f32.mrf.mxu0
    %478 = vdwg.mxu0
    %v480 = vrot.slane %v476, 6
    %v482 = vadd.f32 %v95, %v480
    %v483 = vxor.u32 %v482, 2147483648
    %v484 = vmul.f32 %v483, 1.442695
    %v485 = vpow.pop %v484
    %v486 = vadd.f32 %v485, 1.0
    %v487 = vrcp.pop %v486
    %v488 = vmul.f32 %v486, %v487
    %v489 = vsub.f32 1.0, %v488
    %v490 = vmul.f32 %v487, %v489
    %v491 = vadd.f32 %v487, %v490
    %vm492 = vweird.f32 %v486
    %vm493 = vweird.f32 %v487
    %vm494 = vmor %vm492, %vm493
    %v495 = vsel %vm494, %v487, %v491
    %v496 = vand.u32 2147483647, %v486
    %vm497 = vcmp.eq.f32.partialorder %v496, 8.507059e+37
    %v498 = vand.u32 %v486, 2147483648
    %v499 = vor.u32 1.1754944e-38, %v498
    %v500 = vsel %vm497, %v499, %v495
    %v501 = vmul.f32 1.0, %v500
    %502 = vrot.lane.b32.xlu0 %v480, 64
    %v503 = vpop.permute.xlu0 %502
    %v505 = vmul.f32 %v501, %v503
    %507 = vrot.lane.b32.xlu0 %v505, 64
    %v508 = vpop.permute.xlu0 %507
    %v510 = vadd.f32 %v95, %v508
    %v511 = vtanh.pop %v510
    %v512 = vsub.f32 1.0, %v501
    %514 = vrot.lane.b32.xlu0 %v511, 96
    %v515 = vpop.permute.xlu0 %514
    %v517 = vmul.f32 %v512, %v515
    %v518 = vrot.slane %v452, 6
    %v520 = vmul.f32 %v501, %v518
    %v521 = vadd.f32 %v517, %v520
    %523 = vrot.lane.b32.xlu0 %v521, 96
    %v524 = vpop.permute.xlu0 %523
    %s526 = scalar_lea.vmem %s5, 10
    %527 = vst.msk [vmem:[%s526 - $0x2] sm:$0xc] %vm247, %v524
    %v528 = vpack.c.bf16 %v521, %v521
    %v530 = vrot.slane %v528, 1
    %531 = vrot.lane.b32.xlu0 %v530, 96
    %v532 = vpop.permute.xlu0 %531
    %v534 = vsel %vm117, %v532, 0
    %536 = vmatpush.bf16.msra.mxu0 0
    %537 = vmatpush.bf16.msra.mxu0 0
    %538 = vmatpush.bf16.msra.mxu0 0
    %539 = vmatpush.bf16.msra.mxu0 0
    %540 = vmatpush.bf16.msra.mxu0 0
    %541 = vmatpush.bf16.msra.mxu0 0
    %542 = vmatpush.bf16.msra.mxu0 %v114
    %543 = vmatpush.bf16.msra.mxu0 %v113
    %544 = vmatmul.bf16.gmra.mxu0 %v534
    %v545 = vpop.f32.mrf.mxu0
    %v546 = vadd.f32 %v103, %v545
    %v547 = vpop.f32.mrf.mxu0
    %548 = vdwg.mxu0
    %v550 = vrot.slane %v546, 4
    %v552 = vadd.f32 %v95, %v550
    %v553 = vxor.u32 %v552, 2147483648
    %v554 = vmul.f32 %v553, 1.442695
    %v555 = vpow.pop %v554
    %v556 = vadd.f32 %v555, 1.0
    %v557 = vrcp.pop %v556
    %v558 = vmul.f32 %v556, %v557
    %v559 = vsub.f32 1.0, %v558
    %v560 = vmul.f32 %v557, %v559
    %v561 = vadd.f32 %v557, %v560
    %vm562 = vweird.f32 %v556
    %vm563 = vweird.f32 %v557
    %vm564 = vmor %vm562, %vm563
    %v565 = vsel %vm564, %v557, %v561
    %v566 = vand.u32 2147483647, %v556
    %vm567 = vcmp.eq.f32.partialorder %v566, 8.507059e+37
    %v568 = vand.u32 %v556, 2147483648
    %v569 = vor.u32 1.1754944e-38, %v568
    %v570 = vsel %vm567, %v569, %v565
    %v571 = vmul.f32 1.0, %v570
    %572 = vrot.lane.b32.xlu0 %v550, 64
    %v573 = vpop.permute.xlu0 %572
    %v575 = vmul.f32 %v571, %v573
    %577 = vrot.lane.b32.xlu0 %v575, 64
    %v578 = vpop.permute.xlu0 %577
    %v580 = vadd.f32 %v95, %v578
    %v581 = vtanh.pop %v580
    %v582 = vsub.f32 1.0, %v571
    %584 = vrot.lane.b32.xlu0 %v581, 96
    %v585 = vpop.permute.xlu0 %584
    %v587 = vmul.f32 %v582, %v585
    %v588 = vrot.slane %v521, 6
    %v590 = vmul.f32 %v571, %v588
    %v591 = vadd.f32 %v587, %v590
    %593 = vrot.lane.b32.xlu0 %v591, 96
    %v594 = vpop.permute.xlu0 %593
    %s596 = scalar_lea.vmem %s5, 12
    %597 = vst.msk [vmem:[%s596 - $0x4] sm:$0x30] %vm318, %v594
    %v598 = vpack.c.bf16 %v591, %v591
    %v600 = vrot.slane %v598, 2
    %601 = vrot.lane.b32.xlu0 %v600, 96
    %v602 = vpop.permute.xlu0 %601
    %v604 = vsel %vm117, %v602, 0
    %606 = vmatpush.bf16.msra.mxu0 0
    %607 = vmatpush.bf16.msra.mxu0 0
    %608 = vmatpush.bf16.msra.mxu0 0
    %609 = vmatpush.bf16.msra.mxu0 0
    %610 = vmatpush.bf16.msra.mxu0 0
    %611 = vmatpush.bf16.msra.mxu0 0
    %612 = vmatpush.bf16.msra.mxu0 %v114
    %613 = vmatpush.bf16.msra.mxu0 %v113
    %614 = vmatmul.bf16.gmra.mxu0 %v604
    %v615 = vpop.f32.mrf.mxu0
    %v616 = vadd.f32 %v103, %v615
    %v617 = vpop.f32.mrf.mxu0
    %618 = vdwg.mxu0
    %v620 = vrot.slane %v616, 2
    %v622 = vadd.f32 %v95, %v620
    %v623 = vxor.u32 %v622, 2147483648
    %v624 = vmul.f32 %v623, 1.442695
    %v625 = vpow.pop %v624
    %v626 = vadd.f32 %v625, 1.0
    %v627 = vrcp.pop %v626
    %v628 = vmul.f32 %v626, %v627
    %v629 = vsub.f32 1.0, %v628
    %v630 = vmul.f32 %v627, %v629
    %v631 = vadd.f32 %v627, %v630
    %vm632 = vweird.f32 %v626
    %vm633 = vweird.f32 %v627
    %vm634 = vmor %vm632, %vm633
    %v635 = vsel %vm634, %v627, %v631
    %v636 = vand.u32 2147483647, %v626
    %vm637 = vcmp.eq.f32.partialorder %v636, 8.507059e+37
    %v638 = vand.u32 %v626, 2147483648
    %v639 = vor.u32 1.1754944e-38, %v638
    %v640 = vsel %vm637, %v639, %v635
    %v641 = vmul.f32 1.0, %v640
    %642 = vrot.lane.b32.xlu0 %v620, 64
    %v643 = vpop.permute.xlu0 %642
    %v645 = vmul.f32 %v641, %v643
    %647 = vrot.lane.b32.xlu0 %v645, 64
    %v648 = vpop.permute.xlu0 %647
    %v650 = vadd.f32 %v95, %v648
    %v651 = vtanh.pop %v650
    %v652 = vsub.f32 1.0, %v641
    %654 = vrot.lane.b32.xlu0 %v651, 96
    %v655 = vpop.permute.xlu0 %654
    %v657 = vmul.f32 %v652, %v655
    %v658 = vrot.slane %v591, 6
    %v660 = vmul.f32 %v641, %v658
    %v661 = vadd.f32 %v657, %v660
    %663 = vrot.lane.b32.xlu0 %v661, 96
    %v664 = vpop.permute.xlu0 %663
    %s666 = scalar_lea.vmem %s5, 14
    %667 = vst.msk [vmem:[%s666 - $0x6] sm:$0xc0] %vm389, %v664
    %668 = vst.msk [vmem:[#allocation5 - $0x6] sm:$0xc0] %vm389, %v664
    // Predicated region
    $region26: #{encoder_forward.1} parent=1 // pred_check
      _
    $region27: #{encoder_forward.1} parent=1 // pred_check_branch
      %670 = sbr.rel (0) target = $region29
    $region28: #{encoder_forward.1} parent=1 // pred_region
      _
    $region29: #{encoder_forward.1} parent=1 // pred_fallthru
      _
    // Predicated region
    $region30: #{encoder_forward.1} parent=1 // pred_check
      _
    $region31: #{encoder_forward.1} parent=1 // pred_check_branch
      %672 = sbr.rel (0) target = $region33
    $region32: #{encoder_forward.1} parent=1 // pred_region
      %674 = vsyncadd [#allocation4], 0
      %s676 = sshll.u32 [#allocation5], 4
      %s677 = int_to_ptr.vmem [resolvable:$true] %s676
      %s678 = sshll.u32 %s6, 4
      %s679 = int_to_ptr.hbm [resolvable:$true] %s678
      %681 = dma.vmem_to_hbm [thread:$0]  %s677, 32, %s679, [#allocation4]
    $region33: #{encoder_forward.1} parent=1 // pred_fallthru
      _
    // Predicated region
    $region34: #{encoder_forward.1} parent=1 // pred_check
      _
    $region35: #{encoder_forward.1} parent=1 // pred_check_branch
      %683 = sbr.rel (0) target = $region37
    $region36: #{encoder_forward.1} parent=1 // pred_region
      _
    $region37: #{encoder_forward.1} parent=1 // pred_fallthru
      _
    // Predicated region
    $region38: #{encoder_forward.1} parent=1 // pred_check
      _
    $region39: #{encoder_forward.1} parent=1 // pred_check_branch
      %685 = sbr.rel (0) target = $region41
    $region40: #{encoder_forward.1} parent=1 // pred_region
      %687 = dma.done [#allocation4], 32
    $region41: #{encoder_forward.1} parent=1 // pred_fallthru
      _
    %688 = vsyncpa [#allocation3], 1
    %689 = vsyncpa [#allocation4], 1

</llo_original>
